<compile_context>
chip_gen: v7x
topology: tpu7x:2x2x1
jax: 0.10.0
libtpu: 0.0.40
codegen_flags: <defaults>
</compile_context>

<pallas_src>
import functools

import jax
import jax.numpy as jnp
import numpy as np
from jax.experimental import pallas as pl
from jax.experimental.pallas import tpu as pltpu


_CHUNK_ROWS = 512                      # inner-loop rows per step (multiple of 32)
_TARGET_BLOCK_BYTES = 8 * 1024 * 1024  # per-input DMA block (~32 MiB double-buffered)
_VMEM_LIMIT_BYTES = 48 * 1024 * 1024   # explicit scoped-VMEM cap (fits v7x 64 MiB/TC)


def _cdiv(a, b):
    return (a + b - 1) // b


def _round_up(a, m):
    return _cdiv(a, m) * m


def _plan_tiles(m_rows, L, itemsize, block_bytes, chunk_rows):
    """Pick (blk_rows, chunk, num_tiles, rows_last) for a (m_rows, L) operand.

    chunk_rows must be a multiple of 32 so blocks satisfy f32/bf16/int8 sublane
    multiples; small inputs get a single full-dim block (always legal).
    """
    row_bytes = L * itemsize
    if m_rows <= chunk_rows:
        return m_rows, max(m_rows, 1), 1, m_rows
    chunk = chunk_rows
    chunks_per_blk = max(1, block_bytes // (chunk * row_bytes))
    blk_rows = min(chunk * chunks_per_blk, _round_up(m_rows, chunk))
    num_tiles = _cdiv(m_rows, blk_rows)
    rows_last = m_rows - (num_tiles - 1) * blk_rows
    return blk_rows, chunk, num_tiles, rows_last


def _make_sse_kernel(blk_rows, L, chunk, num_tiles, rows_last):
    """Per-tile sums of squared error over rows -> (1, 1, L) lane-tiled partials."""
    nchunks = blk_rows // chunk
    ragged = rows_last != blk_rows

    def kernel(pred_ref, target_ref, out_ref):
        t = pl.program_id(0)

        def chunk_sse(c, masked):
            if nchunks == 1:
                p = pred_ref[...]
                q = target_ref[...]
            else:
                r0 = pl.multiple_of(c * chunk, chunk)
                p = pred_ref[pl.ds(r0, chunk), :]
                q = target_ref[pl.ds(r0, chunk), :]
            d = p.astype(jnp.float32) - q.astype(jnp.float32)
            if masked:
                rid = jax.lax.broadcasted_iota(jnp.int32, (chunk, 1), 0) + c * chunk
                d = jnp.where(rid < rows_last, d, 0.0)
            return jnp.sum(d * d, axis=0, keepdims=True)          # (1, L)

        def tile_sse(masked):
            if nchunks == 1:
                return chunk_sse(0, masked)
            return jax.lax.fori_loop(
                0, nchunks, lambda c, acc: acc + chunk_sse(c, masked),
                jnp.zeros((1, L), jnp.float32))

        if not ragged:
            out_ref[...] = tile_sse(False).reshape(1, 1, L)
        else:
            @pl.when(t == num_tiles - 1)
            def _():
                out_ref[...] = tile_sse(True).reshape(1, 1, L)

            @pl.when(t != num_tiles - 1)
            def _():
                out_ref[...] = tile_sse(False).reshape(1, 1, L)

    return kernel


def _make_loss_kernel(blk_rows, L, pack, chunk, num_tiles, rows_last):
    """Per-tile sum of sqrt(weighted per-row SSE) -> (1, 1, pack) partials."""
    nchunks = blk_rows // chunk
    ragged = rows_last != blk_rows

    def kernel(pred_ref, target_ref, segw_ref, out_ref):
        t = pl.program_id(0)
        seg_w = segw_ref[...]                           # (L, pack), weights folded in

        def chunk_loss(c, masked):
            if nchunks == 1:
                p = pred_ref[...]
                q = target_ref[...]
            else:
                r0 = pl.multiple_of(c * chunk, chunk)
                p = pred_ref[pl.ds(r0, chunk), :]
                q = target_ref[pl.ds(r0, chunk), :]
            d = p.astype(jnp.float32) - q.astype(jnp.float32)
            # Per-(packed-row, segment) weighted sums on the otherwise idle MXU.
            rows = jnp.dot(d * d, seg_w, preferred_element_type=jnp.float32)
            if masked:
                # Garbage rows only affect their own dot-product rows -> mask after.
                rid = jax.lax.broadcasted_iota(jnp.int32, (chunk, pack), 0) + c * chunk
                rows = jnp.where(rid < rows_last, rows, 0.0)
            return jnp.sum(jnp.sqrt(rows), axis=0, keepdims=True)  # (1, pack)

        def tile_loss(masked):
            if nchunks == 1:
                return chunk_loss(0, masked)
            return jax.lax.fori_loop(
                0, nchunks, lambda c, acc: acc + chunk_loss(c, masked),
                jnp.zeros((1, pack), jnp.float32))

        if not ragged:
            out_ref[...] = tile_loss(False).reshape(1, 1, pack)
        else:
            @pl.when(t == num_tiles - 1)
            def _():
                out_ref[...] = tile_loss(True).reshape(1, 1, pack)

            @pl.when(t != num_tiles - 1)
            def _():
                out_ref[...] = tile_loss(False).reshape(1, 1, pack)

    return kernel


@functools.partial(jax.jit, static_argnames=("update_interval", "momentum",
                                              "block_bytes", "chunk_rows"))
def adaptive_weighted_loss(pred, target, joint_weights, joint_errors,
                           is_training, batch_count,
                           update_interval=10, momentum=0.9,
                           block_bytes=_TARGET_BLOCK_BYTES,
                           chunk_rows=_CHUNK_ROWS):
    B, P, S, J = pred.shape
    n_rows = B * P * S
    n_elems = n_rows * J
    itemsize = jnp.dtype(pred.dtype).itemsize

    # Lane packing: put 128//J logical joint-rows side by side on the lane axis.
    pack = 128 // J if (J <= 128 and 128 % J == 0) else 1
    L = pack * J

    tail = (-n_elems) % L
    if tail == 0:
        # Free reshape (pure bitcast): the common case B*P*S % (128//J) == 0.
        m_rows = n_elems // L
        pred2 = pred.reshape(m_rows, L)
        target2 = target.reshape(m_rows, L)
    else:
        # TODO(synk): this sub-128-element pad still materializes an XLA copy of
        # both tensors; only hit when B*P*S is not a multiple of 128//J.
        m_rows = (n_elems + tail) // L
        pred2 = jnp.pad(pred.reshape(-1), (0, tail)).reshape(m_rows, L)
        target2 = jnp.pad(target.reshape(-1), (0, tail)).reshape(m_rows, L)

    blk_rows, chunk, num_tiles, rows_last = _plan_tiles(
        m_rows, L, itemsize, block_bytes, chunk_rows)
    inv_n = 1.0 / float(n_rows)

    compiler_params = pltpu.CompilerParams(
        dimension_semantics=("parallel",),
        vmem_limit_bytes=_VMEM_LIMIT_BYTES)
    data_spec = pl.BlockSpec((blk_rows, L), lambda t: (t, 0))

    new_count = batch_count + 1
    do_update = jnp.logical_and(is_training, (new_count % update_interval) == 0)
    # TODO(synk): the PyTorch module also print()s the batch counter on update.

    jw = joint_weights.astype(jnp.float32)
    je = joint_errors.astype(jnp.float32)

    sse_kernel = _make_sse_kernel(blk_rows, L, chunk, num_tiles, rows_last)
    loss_kernel = _make_loss_kernel(blk_rows, L, pack, chunk, num_tiles, rows_last)

    def _run_update(_):
        sse_parts = pl.pallas_call(
            sse_kernel,
            out_shape=jax.ShapeDtypeStruct((num_tiles, 1, L), jnp.float32),
            grid_spec=pltpu.PrefetchScalarGridSpec(
                num_scalar_prefetch=0,
                grid=(num_tiles,),
                in_specs=[data_spec, data_spec],
                out_specs=pl.BlockSpec((1, 1, L), lambda t: (t, 0, 0))),
            compiler_params=compiler_params,
        )(pred2, target2)
        sse = jnp.sum(sse_parts, axis=(0, 1))               # (L,) lane-tiled sums
        cur = sse.reshape(pack, J).sum(axis=0) * inv_n      # per-joint mean sq err
        upd_e = momentum * je + (1.0 - momentum) * cur
        upd_w = jax.nn.softmax(upd_e) * float(J)
        return upd_w, upd_e

    def _skip_update(_):
        return jw, je

    new_w, new_e = jax.lax.cond(do_update, _run_update, _skip_update, None)

    # Fold the (possibly updated) weights into the one-hot segment matrix so the
    # hot loop needs no per-element weight multiply:  seg_w[l, p] = w[l%J]*[l//J==p].
    lane = jnp.arange(L, dtype=jnp.int32)
    slot = jnp.arange(pack, dtype=jnp.int32)
    onehot = (lane[:, None] // J == slot[None, :]).astype(jnp.float32)   # (L, pack)
    seg_w = jnp.tile(new_w, pack)[:, None] * onehot                      # (L, pack)

    loss_parts = pl.pallas_call(
        loss_kernel,
        out_shape=jax.ShapeDtypeStruct((num_tiles, 1, pack), jnp.float32),
        grid_spec=pltpu.PrefetchScalarGridSpec(
            num_scalar_prefetch=0,
            grid=(num_tiles,),
            in_specs=[data_spec, data_spec,
                      pl.BlockSpec((L, pack), lambda t: (0, 0))],
            out_specs=pl.BlockSpec((1, 1, pack), lambda t: (t, 0, 0))),
        compiler_params=compiler_params,
    )(pred2, target2, seg_w)

    loss = jnp.sum(loss_parts) * inv_n
    return loss, new_w, new_e, new_count


# ---------------------------------------------------------------------------
# Pure-JAX reference (mirrors the PyTorch forward) for correctness checks.
# ---------------------------------------------------------------------------
def _reference(pred, target, joint_weights, joint_errors,
               is_training, batch_count, update_interval=10, momentum=0.9):
    J = pred.shape[-1]
    pred = pred.astype(jnp.float32)
    target = target.astype(jnp.float32)
    sq = (pred - target) ** 2
    new_count = batch_count + 1
    jw, je = joint_weights, joint_errors
    if is_training and (new_count % update_interval == 0):
        cur = sq.mean(axis=(0, 1, 2))
        je = momentum * je + (1 - momentum) * cur
        jw = jax.nn.softmax(je, axis=0) * J
    loss = jnp.mean(jnp.sqrt(jnp.sum(sq * jw.reshape(1, 1, 1, J), axis=3)))
    return loss, jw, je


if __name__ == "__main__":
    # Small shapes implied by the forward: [batch, num_people, seq_len, n_joints]
    B, P, S, J = 2, 3, 8, 16
    key = jax.random.PRNGKey(0)
    k1, k2 = jax.random.split(key)
    pred = jax.random.normal(k1, (B, P, S, J), dtype=jnp.float32)
    target = jax.random.normal(k2, (B, P, S, J), dtype=jnp.float32)

    joint_weights = jnp.ones((J,), dtype=jnp.float32)
    joint_errors = jnp.zeros((J,), dtype=jnp.float32)

    # --- update branch: batch_count=9, training -> (9+1) % 10 == 0 -----------
    loss, new_w, new_e, new_count = adaptive_weighted_loss(
        pred, target, joint_weights, joint_errors,
        is_training=True, batch_count=9)
    jax.block_until_ready((loss, new_w, new_e, new_count))
    ref_loss, ref_w, ref_e = _reference(
        pred, target, joint_weights, joint_errors, is_training=True, batch_count=9)
    assert np.allclose(np.asarray(loss), np.asarray(ref_loss), rtol=1e-5, atol=1e-5)
    assert np.allclose(np.asarray(new_w), np.asarray(ref_w), rtol=1e-5, atol=1e-5)
    assert np.allclose(np.asarray(new_e), np.asarray(ref_e), rtol=1e-5, atol=1e-5)
    assert int(new_count) == 10

    # --- no-update branch (weights/errors pass through; SSE pass skipped) ----
    loss2, w2, e2, _ = adaptive_weighted_loss(
        pred, target, joint_weights, joint_errors, is_training=False, batch_count=3)
    ref2_loss, ref2_w, ref2_e = _reference(
        pred, target, joint_weights, joint_errors, is_training=False, batch_count=3)
    assert np.allclose(np.asarray(loss2), np.asarray(ref2_loss), rtol=1e-5, atol=1e-5)
    assert np.allclose(np.asarray(w2), np.asarray(ref2_w), rtol=1e-5, atol=1e-5)
    assert np.allclose(np.asarray(e2), np.asarray(ref2_e), rtol=1e-5, atol=1e-5)

    # --- bf16 inputs: native-dtype DMA, f32 cast in-kernel --------------------
    loss3, w3, e3, _ = adaptive_weighted_loss(
        pred.astype(jnp.bfloat16), target.astype(jnp.bfloat16),
        joint_weights, joint_errors, is_training=True, batch_count=9)
    ref3_loss, ref3_w, ref3_e = _reference(
        pred.astype(jnp.bfloat16), target.astype(jnp.bfloat16),
        joint_weights, joint_errors, is_training=True, batch_count=9)
    assert np.allclose(np.asarray(loss3), np.asarray(ref3_loss), rtol=1e-3, atol=1e-3)
    assert np.allclose(np.asarray(w3), np.asarray(ref3_w), rtol=1e-3, atol=1e-3)
    assert np.allclose(np.asarray(e3), np.asarray(ref3_e), rtol=1e-3, atol=1e-3)

    # --- ragged tail: B*P*S not a multiple of 8 (tiny-pad fallback path) ------
    k3, k4 = jax.random.split(jax.random.PRNGKey(1))
    pred_r = jax.random.normal(k3, (2, 3, 7, J), dtype=jnp.float32)
    target_r = jax.random.normal(k4, (2, 3, 7, J), dtype=jnp.float32)
    loss4, w4, e4, _ = adaptive_weighted_loss(
        pred_r, target_r, joint_weights, joint_errors, is_training=True, batch_count=9)
    ref4_loss, ref4_w, ref4_e = _reference(
        pred_r, target_r, joint_weights, joint_errors, is_training=True, batch_count=9)
    assert np.allclose(np.asarray(loss4), np.asarray(ref4_loss), rtol=1e-5, atol=1e-5)
    assert np.allclose(np.asarray(w4), np.asarray(ref4_w), rtol=1e-5, atol=1e-5)
    assert np.allclose(np.asarray(e4), np.asarray(ref4_e), rtol=1e-5, atol=1e-5)

    # --- multi-tile + ragged last block + chunked inner loop (small tiles) ----
    k5, k6 = jax.random.split(jax.random.PRNGKey(2))
    pred_m = jax.random.normal(k5, (2, 3, 120, J), dtype=jnp.float32)   # 720 rows
    target_m = jax.random.normal(k6, (2, 3, 120, J), dtype=jnp.float32)
    loss5, w5, e5, _ = adaptive_weighted_loss(
        pred_m, target_m, joint_weights, joint_errors, is_training=True,
        batch_count=9, block_bytes=32768, chunk_rows=32)
    ref5_loss, ref5_w, ref5_e = _reference(
        pred_m, target_m, joint_weights, joint_errors, is_training=True, batch_count=9)
    assert np.allclose(np.asarray(loss5), np.asarray(ref5_loss), rtol=1e-5, atol=1e-5)
    assert np.allclose(np.asarray(w5), np.asarray(ref5_w), rtol=1e-5, atol=1e-5)
    assert np.allclose(np.asarray(e5), np.asarray(ref5_e), rtol=1e-5, atol=1e-5)

    print("KERNEL_OK")
</pallas_src>

<mosaic_0001>
module attributes {stable_mosaic.version = 11 : i64} {
  func.func @kernel(%arg0: i32, %arg1: memref<6x128xf32, #tpu.memory_space<vmem>>, %arg2: memref<6x128xf32, #tpu.memory_space<vmem>>, %arg3: memref<1x1x128xf32, #tpu.memory_space<vmem>>) attributes {dimension_semantics = [#tpu.dimension_semantics<parallel>], iteration_bounds = array<i64: 1>, scalar_prefetch = 0 : i64, scratch_operands = 0 : i64, tpu.core_type = #tpu.core_type<tc>, window_params = [{transform_indices = @transform_0, window_bounds = array<i64: 6, 128>}, {transform_indices = @transform_1, window_bounds = array<i64: 6, 128>}, {transform_indices = @transform_2, window_bounds = array<i64: 1, 1, 128>}]} {
    %c0 = arith.constant 0 : index
    %c0_0 = arith.constant 0 : index
    %0 = vector.load %arg1[%c0, %c0_0] : memref<6x128xf32, #tpu.memory_space<vmem>>, vector<6x128xf32>
    %c0_1 = arith.constant 0 : index
    %c0_2 = arith.constant 0 : index
    %1 = vector.load %arg2[%c0_1, %c0_2] : memref<6x128xf32, #tpu.memory_space<vmem>>, vector<6x128xf32>
    %2 = arith.subf %0, %1 : vector<6x128xf32>
    %3 = arith.mulf %2, %2 : vector<6x128xf32>
    %cst = arith.constant dense<0.000000e+00> : vector<128xf32>
    %4 = vector.multi_reduction <add>, %3, %cst [0] : vector<6x128xf32> to vector<128xf32>
    %5 = vector.shape_cast %4 : vector<128xf32> to vector<1x128xf32>
    %6 = vector.shape_cast %5 : vector<1x128xf32> to vector<1x1x128xf32>
    %c0_3 = arith.constant 0 : index
    %c0_4 = arith.constant 0 : index
    %c0_5 = arith.constant 0 : index
    %7 = vector.load %arg3[%c0_3, %c0_4, %c0_5] : memref<1x1x128xf32, #tpu.memory_space<vmem>>, vector<1x1x128xf32>
    tpu.vector_store %arg3[%c0_3, %c0_4, %c0_5], %6 {strides = array<i32>} : memref<1x1x128xf32, #tpu.memory_space<vmem>>, vector<1x1x128xf32>,
    return
  }
  func.func @transform_0(%arg0: i32) -> (i32, i32) {
    %c0_i32 = arith.constant 0 : i32
    %c0_i32_0 = arith.constant 0 : i32
    return %arg0, %c0_i32 : i32, i32
  }
  func.func @transform_1(%arg0: i32) -> (i32, i32) {
    %c0_i32 = arith.constant 0 : i32
    %c0_i32_0 = arith.constant 0 : i32
    return %arg0, %c0_i32 : i32, i32
  }
  func.func @transform_2(%arg0: i32) -> (i32, i32, i32) {
    %c0_i32 = arith.constant 0 : i32
    %c0_i32_0 = arith.constant 0 : i32
    %c0_i32_1 = arith.constant 0 : i32
    return %arg0, %c0_i32, %c0_i32_0 : i32, i32, i32
  }
}

module attributes {stable_mosaic.version = 11 : i64} {
  func.func @kernel(%arg0: i32, %arg1: memref<6x128xf32, #tpu.memory_space<vmem>>, %arg2: memref<6x128xf32, #tpu.memory_space<vmem>>, %arg3: memref<128x8xf32, #tpu.memory_space<vmem>>, %arg4: memref<1x1x8xf32, #tpu.memory_space<vmem>>) attributes {dimension_semantics = [#tpu.dimension_semantics<parallel>], iteration_bounds = array<i64: 1>, scalar_prefetch = 0 : i64, scratch_operands = 0 : i64, tpu.core_type = #tpu.core_type<tc>, window_params = [{transform_indices = @transform_0, window_bounds = array<i64: 6, 128>}, {transform_indices = @transform_1, window_bounds = array<i64: 6, 128>}, {pipeline_mode = #tpu.pipeline_mode<synchronous>, transform_indices = @transform_2, window_bounds = array<i64: 128, 8>}, {transform_indices = @transform_3, window_bounds = array<i64: 1, 1, 8>}]} {
    %c0 = arith.constant 0 : index
    %c0_0 = arith.constant 0 : index
    %0 = vector.load %arg3[%c0, %c0_0] : memref<128x8xf32, #tpu.memory_space<vmem>>, vector<128x8xf32>
    %c0_1 = arith.constant 0 : index
    %c0_2 = arith.constant 0 : index
    %1 = vector.load %arg1[%c0_1, %c0_2] : memref<6x128xf32, #tpu.memory_space<vmem>>, vector<6x128xf32>
    %c0_3 = arith.constant 0 : index
    %c0_4 = arith.constant 0 : index
    %2 = vector.load %arg2[%c0_3, %c0_4] : memref<6x128xf32, #tpu.memory_space<vmem>>, vector<6x128xf32>
    %3 = arith.subf %1, %2 : vector<6x128xf32>
    %4 = arith.mulf %3, %3 : vector<6x128xf32>
    %cst = arith.constant dense<0.000000e+00> : vector<6x8xf32>
    %5 = tpu.matmul %4, %0, %cst {dimension_numbers = #tpu.dot_dimension_numbers<[1], [0], [0], [1], [0, 0, 1, 1], [], []>} : vector<6x128xf32>, vector<128x8xf32>, vector<6x8xf32> -> vector<6x8xf32>
    %6 = math.sqrt %5 : vector<6x8xf32>
    %cst_5 = arith.constant dense<0.000000e+00> : vector<8xf32>
    %7 = vector.multi_reduction <add>, %6, %cst_5 [0] : vector<6x8xf32> to vector<8xf32>
    %8 = vector.shape_cast %7 : vector<8xf32> to vector<1x8xf32>
    %9 = vector.shape_cast %8 : vector<1x8xf32> to vector<1x1x8xf32>
    %c0_6 = arith.constant 0 : index
    %c0_7 = arith.constant 0 : index
    %c0_8 = arith.constant 0 : index
    %10 = vector.load %arg4[%c0_6, %c0_7, %c0_8] : memref<1x1x8xf32, #tpu.memory_space<vmem>>, vector<1x1x8xf32>
    tpu.vector_store %arg4[%c0_6, %c0_7, %c0_8], %9 {strides = array<i32>} : memref<1x1x8xf32, #tpu.memory_space<vmem>>, vector<1x1x8xf32>,
    return
  }
  func.func @transform_0(%arg0: i32) -> (i32, i32) {
    %c0_i32 = arith.constant 0 : i32
    %c0_i32_0 = arith.constant 0 : i32
    return %arg0, %c0_i32 : i32, i32
  }
  func.func @transform_1(%arg0: i32) -> (i32, i32) {
    %c0_i32 = arith.constant 0 : i32
    %c0_i32_0 = arith.constant 0 : i32
    return %arg0, %c0_i32 : i32, i32
  }
  func.func @transform_2(%arg0: i32) -> (i32, i32) {
    %c0_i32 = arith.constant 0 : i32
    %c0_i32_0 = arith.constant 0 : i32
    %c0_i32_1 = arith.constant 0 : i32
    return %c0_i32, %c0_i32_0 : i32, i32
  }
  func.func @transform_3(%arg0: i32) -> (i32, i32, i32) {
    %c0_i32 = arith.constant 0 : i32
    %c0_i32_0 = arith.constant 0 : i32
    %c0_i32_1 = arith.constant 0 : i32
    return %arg0, %c0_i32, %c0_i32_0 : i32, i32, i32
  }
}

</mosaic_0001>

<llo_original>
// kernel: mul.21
$region0: #{mul.21}
  %s0 = inlined_call_operand.vmem [shape: f32[8,16], index: 0, kind: input, shape index: {}]
  %s1 = inlined_call_operand.vmem [shape: f32[128], index: 1, kind: output, shape index: {}]
  $region1: #{mul.21} parent=0
    #allocation0 [shape = 'u8[4096]{0}', space=vmem, size = 0x1000, scoped, tag = 'scoped mem for output reshape']
    %v2 = vld [vmem:[%s0] sm:$0x1]
    %vm3 = vcmask 130048
    %4 = vst.msk [vmem:[#allocation0] sm:$0x1] %vm3, %v2
    %s5 = scalar_lea.vmem %s0, 7
    %v6 = vld [vmem:[%s5] sm:$0x1]
    %7 = vrot.lane.b32.xlu0 %v6, 112
    %v8 = vpop.permute.xlu0 %7
    %vm9 = vcmask 1048448
    %10 = vst.msk [vmem:[#allocation0] sm:$0x1] %vm9, %v8
    %s11 = scalar_lea.vmem %s0, 6
    %v12 = vld [vmem:[%s11] sm:$0x1]
    %13 = vrot.lane.b32.xlu0 %v12, 96
    %v14 = vpop.permute.xlu0 %13
    %vm15 = vcmask 917248
    %16 = vst.msk [vmem:[#allocation0] sm:$0x1] %vm15, %v14
    %s17 = scalar_lea.vmem %s0, 5
    %v18 = vld [vmem:[%s17] sm:$0x1]
    %19 = vrot.lane.b32.xlu0 %v18, 80
    %v20 = vpop.permute.xlu0 %19
    %vm21 = vcmask 786048
    %22 = vst.msk [vmem:[#allocation0] sm:$0x1] %vm21, %v20
    %s23 = scalar_lea.vmem %s0, 4
    %v24 = vld [vmem:[%s23] sm:$0x1]
    %25 = vrot.lane.b32.xlu0 %v24, 64
    %v26 = vpop.permute.xlu0 %25
    %vm27 = vcmask 654848
    %28 = vst.msk [vmem:[#allocation0] sm:$0x1] %vm27, %v26
    %s29 = scalar_lea.vmem %s0, 3
    %v30 = vld [vmem:[%s29] sm:$0x1]
    %31 = vrot.lane.b32.xlu0 %v30, 48
    %v32 = vpop.permute.xlu0 %31
    %vm33 = vcmask 523648
    %34 = vst.msk [vmem:[#allocation0] sm:$0x1] %vm33, %v32
    %s35 = scalar_lea.vmem %s0, 2
    %v36 = vld [vmem:[%s35] sm:$0x1]
    %37 = vrot.lane.b32.xlu0 %v36, 32
    %v38 = vpop.permute.xlu0 %37
    %vm39 = vcmask 392448
    %40 = vst.msk [vmem:[#allocation0] sm:$0x1] %vm39, %v38
    %s41 = scalar_lea.vmem %s0, 1
    %v42 = vld [vmem:[%s41] sm:$0x1]
    %43 = vrot.lane.b32.xlu0 %v42, 16
    %v44 = vpop.permute.xlu0 %43
    %vm45 = vcmask 261248
    %46 = vst.msk [vmem:[#allocation0] sm:$0x1] %vm45, %v44
    %s48 = sshllo.u32 0, 1
    %v50 = vld [vmem:[#allocation0] sm:%s48]
    %s51 = sshllo.u32 0, 1
    %52 = vst [vmem:[%s1] sm:%s51] %v50

// kernel: tile.11
$region0: #{tile.11}
  #allocation0 [shape = 's32[1]{0}', space=sflag, size = 0x4, scoped, tag = 'scoped memory for tile.11']
  %s0 = inlined_call_operand.vmem [shape: f32[16], index: 0, kind: input, shape index: {}]
  %s1 = inlined_call_operand.vmem [shape: f32[8,16], index: 1, kind: output, shape index: {}]
  // Predicated region
  $region2: #{tile.11} parent=0 // pred_check
    _
  $region3: #{tile.11} parent=0 // pred_check_branch
    %3 = sbr.rel (0) target = $region5
  $region4: #{tile.11} parent=0 // pred_region
    _
  $region5: #{tile.11} parent=0 // pred_fallthru
    _
  %v4 = vld [vmem:[%s0] ss:$0 sm:$0xff]
  %5 = vst [vmem:[%s1] sm:$0xff] %v4

// kernel: mul.23
$region0: #{mul.23}
  #allocation2 [shape = 's32[1]{0}', space=sflag, size = 0x4, scoped, tag = 'scoped memory for mul.23']
  %s0 = inlined_call_operand.vmem [shape: f32[128], index: 0, kind: input, shape index: {}]
  %s1 = inlined_call_operand.hbm [shape: f32[128,8], index: 1, kind: output, shape index: {}]
  $region1: #{mul.23} parent=0
    #allocation0 [shape = 'u8[65536]{0}', space=vmem, size = 0x10000, scoped, tag = 'operand span for operand 1']
    #allocation1 [shape = 's32[1]{0}', space=sflag, size = 0x4, scoped, tag = 'scoped memory for mul.23']
    %2 = vsyncpa [#allocation1], 0
    // Predicated region
    $region2: #{mul.23} parent=1 // pred_check
      _
    $region3: #{mul.23} parent=1 // pred_check_branch
      %4 = sbr.rel (0) target = $region5
    $region4: #{mul.23} parent=1 // pred_region
      _
    $region5: #{mul.23} parent=1 // pred_fallthru
      _
    %v5 = vld [vmem:[%s0] ss:$0 sm:$0xff]
    %7 = vbcast.lane.b32.xlu0 %v5, 256
    %v8 = vpop.permute.xlu0 %7
    %9 = vst [vmem:[#allocation0] sm:$0xff] %v8
    %v10 = vld [vmem:[%s0] ss:$0 sm:$0xff]
    %s12 = sor.u32 256, 8
    %13 = vbcast.lane.b32.xlu0 %v10, %s12
    %v14 = vpop.permute.xlu0 %13
    %s15 = scalar_lea.vmem [#allocation0], 8
    %16 = vst [vmem:[%s15] sm:$0xff] %v14
    %v17 = vld [vmem:[%s0] ss:$0 sm:$0xff]
    %s19 = sor.u32 256, 16
    %20 = vbcast.lane.b32.xlu0 %v17, %s19
    %v21 = vpop.permute.xlu0 %20
    %s22 = scalar_lea.vmem [#allocation0], 16
    %23 = vst [vmem:[%s22] sm:$0xff] %v21
    %v24 = vld [vmem:[%s0] ss:$0 sm:$0xff]
    %s26 = sor.u32 256, 24
    %27 = vbcast.lane.b32.xlu0 %v24, %s26
    %v28 = vpop.permute.xlu0 %27
    %s29 = scalar_lea.vmem [#allocation0], 24
    %30 = vst [vmem:[%s29] sm:$0xff] %v28
    %v31 = vld [vmem:[%s0] ss:$0 sm:$0xff]
    %s33 = sor.u32 256, 32
    %34 = vbcast.lane.b32.xlu0 %v31, %s33
    %v35 = vpop.permute.xlu0 %34
    %s36 = scalar_lea.vmem [#allocation0], 32
    %37 = vst [vmem:[%s36] sm:$0xff] %v35
    %v38 = vld [vmem:[%s0] ss:$0 sm:$0xff]
    %s40 = sor.u32 256, 40
    %41 = vbcast.lane.b32.xlu0 %v38, %s40
    %v42 = vpop.permute.xlu0 %41
    %s43 = scalar_lea.vmem [#allocation0], 40
    %44 = vst [vmem:[%s43] sm:$0xff] %v42
    %v45 = vld [vmem:[%s0] ss:$0 sm:$0xff]
    %s47 = sor.u32 256, 48
    %48 = vbcast.lane.b32.xlu0 %v45, %s47
    %v49 = vpop.permute.xlu0 %48
    %s50 = scalar_lea.vmem [#allocation0], 48
    %51 = vst [vmem:[%s50] sm:$0xff] %v49
    %v52 = vld [vmem:[%s0] ss:$0 sm:$0xff]
    %s54 = sor.u32 256, 56
    %55 = vbcast.lane.b32.xlu0 %v52, %s54
    %v56 = vpop.permute.xlu0 %55
    %s57 = scalar_lea.vmem [#allocation0], 56
    %58 = vst [vmem:[%s57] sm:$0xff] %v56
    %v59 = vld [vmem:[%s0] ss:$0 sm:$0xff]
    %s61 = sor.u32 256, 64
    %62 = vbcast.lane.b32.xlu0 %v59, %s61
    %v63 = vpop.permute.xlu0 %62
    %s64 = scalar_lea.vmem [#allocation0], 64
    %65 = vst [vmem:[%s64] sm:$0xff] %v63
    %v66 = vld [vmem:[%s0] ss:$0 sm:$0xff]
    %s68 = sor.u32 256, 72
    %69 = vbcast.lane.b32.xlu0 %v66, %s68
    %v70 = vpop.permute.xlu0 %69
    %s71 = scalar_lea.vmem [#allocation0], 72
    %72 = vst [vmem:[%s71] sm:$0xff] %v70
    %v73 = vld [vmem:[%s0] ss:$0 sm:$0xff]
    %s75 = sor.u32 256, 80
    %76 = vbcast.lane.b32.xlu0 %v73, %s75
    %v77 = vpop.permute.xlu0 %76
    %s78 = scalar_lea.vmem [#allocation0], 80
    %79 = vst [vmem:[%s78] sm:$0xff] %v77
    %v80 = vld [vmem:[%s0] ss:$0 sm:$0xff]
    %s82 = sor.u32 256, 88
    %83 = vbcast.lane.b32.xlu0 %v80, %s82
    %v84 = vpop.permute.xlu0 %83
    %s85 = scalar_lea.vmem [#allocation0], 88
    %86 = vst [vmem:[%s85] sm:$0xff] %v84
    %v87 = vld [vmem:[%s0] ss:$0 sm:$0xff]
    %s89 = sor.u32 256, 96
    %90 = vbcast.lane.b32.xlu0 %v87, %s89
    %v91 = vpop.permute.xlu0 %90
    %s92 = scalar_lea.vmem [#allocation0], 96
    %93 = vst [vmem:[%s92] sm:$0xff] %v91
    %v94 = vld [vmem:[%s0] ss:$0 sm:$0xff]
    %s96 = sor.u32 256, 104
    %97 = vbcast.lane.b32.xlu0 %v94, %s96
    %v98 = vpop.permute.xlu0 %97
    %s99 = scalar_lea.vmem [#allocation0], 104
    %100 = vst [vmem:[%s99] sm:$0xff] %v98
    %v101 = vld [vmem:[%s0] ss:$0 sm:$0xff]
    %s103 = sor.u32 256, 112
    %104 = vbcast.lane.b32.xlu0 %v101, %s103
    %v105 = vpop.permute.xlu0 %104
    %s106 = scalar_lea.vmem [#allocation0], 112
    %107 = vst [vmem:[%s106] sm:$0xff] %v105
    %v108 = vld [vmem:[%s0] ss:$0 sm:$0xff]
    %s110 = sor.u32 256, 120
    %111 = vbcast.lane.b32.xlu0 %v108, %s110
    %v112 = vpop.permute.xlu0 %111
    %s113 = scalar_lea.vmem [#allocation0], 120
    %114 = vst [vmem:[%s113] sm:$0xff] %v112
    %s116 = ssub.s32 2048, 2048
    %117 = vsyncadd [#allocation1], %s116
    %s118 = sshll.u32 [#allocation0], 4
    %s119 = int_to_ptr.vmem [resolvable:$true] %s118
    %124 = dma.vmem_to_hbm [thread:$0]  %s119, 2048, %s1, [#allocation1], 128, 128, 8
    %125 = dma.done [#allocation1], 2048
    %126 = vsyncpa [#allocation1], 1

// kernel: branch_1_fun.1
$region0: #{branch_1_fun.1}
  #allocation0 [shape = 'u32[]', space=smem, size = 0x4, offset = 0x4, fixed_abs, tag = 'smem constant byte address 0x4 - core index']
  #allocation1 [shape = 'u32[144,128]{1,0:T(1,128)}', space=vmem, size = 0x12000, scoped, tag = 'internal scratch']
  %s0 = inlined_call_operand.vmem [shape: f32[6,128], index: 0, kind: input, shape index: {}]
  %s1 = inlined_call_operand.vmem [shape: f32[6,128], index: 1, kind: input, shape index: {}]
  %s2 = inlined_call_operand.vmem [shape: f32[1,1,128], index: 2, kind: output, shape index: {}]
  %s3 = sld [smem:[#allocation0]]
  $region18: #{branch_1_fun.1} parent=0
    _
  %s5 = ssub.s32 1, %s3
  %s6 = scalar_select 0, %s5, %s3
  // Predicated region
  $region2: #{branch_1_fun.1} parent=0 // pred_check
    _
  $region3: #{branch_1_fun.1} parent=0 // pred_check_branch
    %8 = sbr.rel (0) target = $region5
  $region4: #{branch_1_fun.1} parent=0 // pred_region
    _
  $region5: #{branch_1_fun.1} parent=0 // pred_fallthru
    _
  // Predicated region
  $region6: #{branch_1_fun.1} parent=0 // pred_check
    _
  $region7: #{branch_1_fun.1} parent=0 // pred_check_branch
    %10 = sbr.rel (0) target = $region9
  $region8: #{branch_1_fun.1} parent=0 // pred_region
    _
  $region9: #{branch_1_fun.1} parent=0 // pred_fallthru
    _
  %v11 = vld [vmem:[%s0] sm:$0x3f]
  %v12 = vld [vmem:[%s1] sm:$0x3f]
  %v13 = vsub.f32 %v11, %v12
  %v14 = vmul.f32 %v13, %v13
  %vm15 = vcmask 1045504
  %v16 = vsel %vm15, %v14, 0.0
  %v17 = vrot.slane %v16, 4
  %v18 = vadd.f32 %v16, %v17
  %v19 = vrot.slane %v18, 2
  %v20 = vadd.f32 %v18, %v19
  %v21 = vrot.slane %v20, 1
  %v22 = vadd.f32 %v20, %v21
  %23 = vst [vmem:[%s2] sm:$0x1] %v22
  // Predicated region
  $region10: #{branch_1_fun.1} parent=0 // pred_check
    _
  $region11: #{branch_1_fun.1} parent=0 // pred_check_branch
    %25 = sbr.rel (0) target = $region13
  $region12: #{branch_1_fun.1} parent=0 // pred_region
    _
  $region13: #{branch_1_fun.1} parent=0 // pred_fallthru
    _
  // Predicated region
  $region14: #{branch_1_fun.1} parent=0 // pred_check
    _
  $region15: #{branch_1_fun.1} parent=0 // pred_check_branch
    %27 = sbr.rel (0) target = $region17
  $region16: #{branch_1_fun.1} parent=0 // pred_region
    _
  $region17: #{branch_1_fun.1} parent=0 // pred_fallthru
    _

// kernel: adaptive_weighted_loss.1
$region0: #{adaptive_weighted_loss.1}
  #allocation0 [shape = 'u32[]', space=smem, size = 0x4, offset = 0x4, fixed_abs, tag = 'smem constant byte address 0x4 - core index']
  #allocation1 [shape = 'u32[144,128]{1,0:T(1,128)}', space=vmem, size = 0x12000, scoped, tag = 'internal scratch']
  %s0 = inlined_call_operand.vmem [shape: f32[6,128], index: 0, kind: input, shape index: {}]
  %s1 = inlined_call_operand.vmem [shape: f32[6,128], index: 1, kind: input, shape index: {}]
  %s2 = inlined_call_operand.vmem [shape: f32[128,8], index: 2, kind: input, shape index: {}]
  %s3 = inlined_call_operand.vmem [shape: f32[1,1,8], index: 3, kind: output, shape index: {}]
  %s4 = sld [smem:[#allocation0]]
  $region22: #{adaptive_weighted_loss.1} parent=0
    _
  %s6 = ssub.s32 1, %s4
  %s7 = scalar_select 0, %s6, %s4
  // Predicated region
  $region2: #{adaptive_weighted_loss.1} parent=0 // pred_check
    _
  $region3: #{adaptive_weighted_loss.1} parent=0 // pred_check_branch
    %9 = sbr.rel (0) target = $region5
  $region4: #{adaptive_weighted_loss.1} parent=0 // pred_region
    _
  $region5: #{adaptive_weighted_loss.1} parent=0 // pred_fallthru
    _
  // Predicated region
  $region6: #{adaptive_weighted_loss.1} parent=0 // pred_check
    _
  $region7: #{adaptive_weighted_loss.1} parent=0 // pred_check_branch
    %11 = sbr.rel (0) target = $region9
  $region8: #{adaptive_weighted_loss.1} parent=0 // pred_region
    _
  $region9: #{adaptive_weighted_loss.1} parent=0 // pred_fallthru
    _
  // Predicated region
  $region10: #{adaptive_weighted_loss.1} parent=0 // pred_check
    _
  $region11: #{adaptive_weighted_loss.1} parent=0 // pred_check_branch
    %13 = sbr.rel (0) target = $region13
  $region12: #{adaptive_weighted_loss.1} parent=0 // pred_region
    _
  $region13: #{adaptive_weighted_loss.1} parent=0 // pred_fallthru
    _
  %v14 = vld [vmem:[%s2] sm:$0xff]
  %v15 = vld [vmem:[%s2 + $0x8] sm:$0xff]
  %v16 = vld [vmem:[%s2 + $0x10] sm:$0xff]
  %v17 = vld [vmem:[%s2 + $0x18] sm:$0xff]
  %v18 = vld [vmem:[%s2 + $0x20] sm:$0xff]
  %v19 = vld [vmem:[%s2 + $0x28] sm:$0xff]
  %v20 = vld [vmem:[%s2 + $0x30] sm:$0xff]
  %v21 = vld [vmem:[%s2 + $0x38] sm:$0xff]
  %v22 = vld [vmem:[%s2 + $0x40] sm:$0xff]
  %v23 = vld [vmem:[%s2 + $0x48] sm:$0xff]
  %v24 = vld [vmem:[%s2 + $0x50] sm:$0xff]
  %v25 = vld [vmem:[%s2 + $0x58] sm:$0xff]
  %v26 = vld [vmem:[%s2 + $0x60] sm:$0xff]
  %v27 = vld [vmem:[%s2 + $0x68] sm:$0xff]
  %v28 = vld [vmem:[%s2 + $0x70] sm:$0xff]
  %v29 = vld [vmem:[%s2 + $0x78] sm:$0xff]
  %v30 = vld [vmem:[%s0] sm:$0x3f]
  %v31 = vld [vmem:[%s1] sm:$0x3f]
  %v32 = vsub.f32 %v30, %v31
  %v33 = vmul.f32 %v32, %v32
  %34 = vmatprep.subr.mxu0 0.0
  %35 = vmatpush1.msra.mxu0 %v14
  %36 = vmatprep.subr.mxu0 0.0
  %37 = vmatpush1.msra.mxu0 %v15
  %38 = vmatprep.subr.mxu0 0.0
  %39 = vmatpush1.msra.mxu0 %v16
  %40 = vmatprep.subr.mxu0 0.0
  %41 = vmatpush1.msra.mxu0 %v17
  %42 = vmatprep.subr.mxu0 0.0
  %43 = vmatpush1.msra.mxu0 %v18
  %44 = vmatprep.subr.mxu0 0.0
  %45 = vmatpush1.msra.mxu0 %v19
  %46 = vmatprep.subr.mxu0 0.0
  %47 = vmatpush1.msra.mxu0 %v20
  %48 = vmatprep.subr.mxu0 0.0
  %49 = vmatpush1.msra.mxu0 %v21
  %50 = vmatprep.subr.mxu0 0.0
  %51 = vmatpush1.msra.mxu0 %v22
  %52 = vmatprep.subr.mxu0 0.0
  %53 = vmatpush1.msra.mxu0 %v23
  %54 = vmatprep.subr.mxu0 0.0
  %55 = vmatpush1.msra.mxu0 %v24
  %56 = vmatprep.subr.mxu0 0.0
  %57 = vmatpush1.msra.mxu0 %v25
  %58 = vmatprep.subr.mxu0 0.0
  %59 = vmatpush1.msra.mxu0 %v26
  %60 = vmatprep.subr.mxu0 0.0
  %61 = vmatpush1.msra.mxu0 %v27
  %62 = vmatprep.subr.mxu0 0.0
  %63 = vmatpush1.msra.mxu0 %v28
  %64 = vmatprep.subr.mxu0 0.0
  %65 = vmatpush1.msra.mxu0 %v29
  %66 = vmatprep.subr.mxu0 0.0
  %67 = vmatpush1.msra.mxu0 0.0
  %68 = vmatprep.subr.mxu0 0.0
  %69 = vmatpush1.msra.mxu0 0.0
  %70 = vmatprep.subr.mxu0 0.0
  %71 = vmatpush1.msra.mxu0 0.0
  %72 = vmatprep.subr.mxu0 0.0
  %73 = vmatpush1.msra.mxu0 0.0
  %74 = vmatprep.subr.mxu0 0.0
  %75 = vmatpush1.msra.mxu0 0.0
  %76 = vmatprep.subr.mxu0 0.0
  %77 = vmatpush1.msra.mxu0 0.0
  %78 = vmatprep.subr.mxu0 0.0
  %79 = vmatpush1.msra.mxu0 0.0
  %80 = vmatprep.subr.mxu0 0.0
  %81 = vmatpush1.msra.mxu0 0.0
  %82 = vmatprep.subr.mxu0 0.0
  %83 = vmatpush1.msra.mxu0 0.0
  %84 = vmatprep.subr.mxu0 0.0
  %85 = vmatpush1.msra.mxu0 0.0
  %86 = vmatprep.subr.mxu0 0.0
  %87 = vmatpush1.msra.mxu0 0.0
  %88 = vmatprep.subr.mxu0 0.0
  %89 = vmatpush1.msra.mxu0 0.0
  %90 = vmatprep.subr.mxu0 0.0
  %91 = vmatpush1.msra.mxu0 0.0
  %92 = vmatprep.subr.mxu0 0.0
  %93 = vmatpush1.msra.mxu0 0.0
  %94 = vmatprep.subr.mxu0 0.0
  %95 = vmatpush1.msra.mxu0 0.0
  %96 = vmatprep.subr.mxu0 0.0
  %97 = vmatpush1.msra.mxu0 0.0
  %98 = vmatprep.mubr.f32.mxu0 0.0
  %99 = vmatmul.mubr.f32.gmra.mrb[0].mxu0 %v33
  %v100 = vpop.f32.mrb[0].mxu0
  %v101 = vadd.f32 0.0, %v100
  %v102 = vpop.f32.mrb[0].mxu0
  %103 = vdwg.mxu0
  %v104 = vrsqrt.pop %v101
  %v105 = vmul.f32 %v101, %v104
  %vm106 = vcmp.eq.f32.partialorder %v101, inf
  %v107 = vsel %vm106, %v101, %v105
  %vm108 = vcmp.eq.f32.partialorder %v101, 0.0
  %v109 = vand.u32 %v101, 2147483648
  %v110 = vsel %vm108, %v109, %v107
  %vm111 = vcmask 62464
  %v112 = vsel %vm111, %v110, 0.0
  %v113 = vrot.slane %v112, 4
  %v114 = vadd.f32 %v112, %v113
  %v115 = vrot.slane %v114, 2
  %v116 = vadd.f32 %v114, %v115
  %v117 = vrot.slane %v116, 1
  %v118 = vadd.f32 %v116, %v117
  %vm119 = vcmask 57344
  %120 = vst.msk [vmem:[%s3] sm:$0x1] %vm119, %v118
  // Predicated region
  $region14: #{adaptive_weighted_loss.1} parent=0 // pred_check
    _
  $region15: #{adaptive_weighted_loss.1} parent=0 // pred_check_branch
    %122 = sbr.rel (0) target = $region17
  $region16: #{adaptive_weighted_loss.1} parent=0 // pred_region
    _
  $region17: #{adaptive_weighted_loss.1} parent=0 // pred_fallthru
    _
  // Predicated region
  $region18: #{adaptive_weighted_loss.1} parent=0 // pred_check
    _
  $region19: #{adaptive_weighted_loss.1} parent=0 // pred_check_branch
    %124 = sbr.rel (0) target = $region21
  $region20: #{adaptive_weighted_loss.1} parent=0 // pred_region
    _
  $region21: #{adaptive_weighted_loss.1} parent=0 // pred_fallthru
    _

</llo_original>
